<compile_context>
chip_gen: v5e
topology: v5e:2x2
jax: 0.10.0
libtpu: 0.0.40
codegen_flags: <defaults>
</compile_context>

<pallas_src>
import functools

import jax
import jax.numpy as jnp
from jax.experimental import pallas as pl
from jax.experimental.pallas import tpu as pltpu


def _bahdanau_kernel(*refs, multiple, matmul_dtype):
    """refs = (enc, [enc1..], w_stack, b_sum, vw, ctx_out, attn_out).

    enc        : (Bt, S, U) f32   -- also used (exactly) for the context bmm
    enc1..     : (Bt, S, U) matmul_dtype
    w_stack    : (multiple, U, U) matmul_dtype, pre-transposed (x @ w_stack[i])
    b_sum      : (1, U) f32  summed projection biases
    vw         : (1, U) f32  scoring vector (V bias dropped: softmax-invariant)
    ctx_out    : (Bt, U) f32
    attn_out   : (Bt, S) f32
    """
    x_refs = refs[:multiple]
    w_ref, b_ref, v_ref, ctx_ref, attn_ref = refs[multiple:multiple + 5]

    enc_ref = x_refs[0]
    bt, s_len, u = enc_ref.shape

    enc = enc_ref[...]                                           # (Bt, S, U) f32

    # Fused projections: `multiple` MXU dots accumulated in f32.
    lhs0 = enc.reshape(bt * s_len, u).astype(matmul_dtype)
    h = jnp.dot(lhs0, w_ref[0], preferred_element_type=jnp.float32)
    for idx in range(1, multiple):
        xi = x_refs[idx][...].reshape(bt * s_len, u)             # already matmul_dtype
        h = h + jnp.dot(xi, w_ref[idx], preferred_element_type=jnp.float32)

    h = h.reshape(bt, s_len, u) + b_ref[...]                     # (Bt, S, U) f32
    t = jnp.tanh(h)

    # score = V(t): degenerate N=1 matvec -> VPU multiply + lane reduce.
    score = jnp.sum(t * v_ref[...], axis=-1)                     # (Bt, S)

    # softmax over the sequence axis (torch dim=1); exact reciprocal since the
    # attention weights are an external output.
    m = jnp.max(score, axis=-1, keepdims=True)
    e = jnp.exp(score - m)
    attn = e / jnp.sum(e, axis=-1, keepdims=True)                # (Bt, S) f32

    # context = attn @ enc: batched MXU dot contracting S (attn lanes vs enc
    # sublanes -> no explicit relayout), f32 operands for exact numerics.
    ctx = jnp.einsum("bqs,bsu->bqu", attn[:, None, :], enc,
                     preferred_element_type=jnp.float32)         # (Bt, 1, U)

    ctx_ref[...] = ctx[:, 0, :].astype(ctx_ref.dtype)            # (Bt, U)
    attn_ref[...] = attn.astype(attn_ref.dtype)                  # (Bt, S)


def _tpu_vmem_capacity_bytes():
    """Physical VMEM per TensorCore; conservative fallback if unqueryable."""
    cap = 128 * 1024 * 1024
    try:
        info = pltpu.get_tpu_info()
        cap = int(getattr(info, "vmem_capacity_bytes", cap))
    except Exception:
        pass
    return cap


def _pick_block_b(batch, seq, units, multiple, mm_itemsize, vmem_budget):
    """Largest legal batch tile fitting the VMEM budget.

    The 2-D output blocks need block_b % 8 == 0 or block_b == (padded) batch;
    we also aim for >= 2 grid steps so both TensorCores get work on v7x
    (harmless extra pipeline step on single-TC v5e/v6e).
    """
    # Grid-invariant operands (weights double-buffered by default + bias/V).
    fixed = 2 * multiple * units * units * mm_itemsize + 4 * 2 * units * 4
    per_b = (
        2 * seq * units * 4                                       # enc (f32), double-buffered
        + 2 * max(multiple - 1, 0) * seq * units * mm_itemsize    # extra inputs, double-buffered
        + 4 * seq * units * 4                                     # f32 temporaries (cast, h, t, ...)
        + 2 * (units + seq) * 4                                   # outputs, double-buffered
    )
    fit = max(1, int((vmem_budget - fixed) // per_b))
    if batch <= 8:
        return batch                       # single whole-batch block (always legal)
    half = -(-batch // 2)                  # ceil(batch/2) -> >= 2 grid steps
    bb = min(fit, half)
    bb = (bb // 8) * 8
    if bb == 0:
        bb = min(8, batch)                 # batch will be padded to a multiple of 8
    return bb


def bahdanau_attention(enc, enc1, enc2, enc3, params, *, multiple,
                       block_b=None, matmul_dtype=jnp.bfloat16):
    """enc*: (B, S, U) float32. Returns (context (B,1,U), attn (B,1,S))."""
    B, S, U = enc.shape
    w1, b1, w2, b2, w3, b3, w4, b4, vw, vb = params
    del vb  # constant bias on the score cancels in the softmax

    # Order matches the torch forward: W_2(x) + W_1(x1) + W_3(x2) + W_4(x3).
    xs = [enc, enc1, enc2, enc3][:multiple]
    ws = [w2, w1, w3, w4][:multiple]
    bs = [b2, b1, b3, b4][:multiple]

    mm_dtype = jnp.dtype(matmul_dtype)
    # enc stays f32 (needed exactly for the context bmm); the extra encoder
    # inputs and all projection weights travel in matmul_dtype.
    xs = [xs[0].astype(jnp.float32)] + [x.astype(mm_dtype) for x in xs[1:]]
    w_stack = jnp.stack([w.T.astype(mm_dtype) for w in ws], axis=0)   # (multiple, U, U)
    b_sum = functools.reduce(jnp.add, bs).reshape(1, U).astype(jnp.float32)
    vw2 = vw.reshape(1, U).astype(jnp.float32)

    vmem_cap = _tpu_vmem_capacity_bytes()
    if block_b is None:
        block_b = _pick_block_b(B, S, U, multiple, mm_dtype.itemsize,
                                vmem_budget=int(vmem_cap * 0.4))

    # Pad the batch to a multiple of block_b (no divisor requirement on B).
    B_pad = -(-B // block_b) * block_b
    if B_pad != B:
        pad = ((0, B_pad - B), (0, 0), (0, 0))
        xs = [jnp.pad(x, pad) for x in xs]
    grid = (B_pad // block_b,)

    kernel = functools.partial(_bahdanau_kernel, multiple=multiple,
                               matmul_dtype=mm_dtype)

    x_spec = pl.BlockSpec((block_b, S, U), lambda i: (i, 0, 0))
    in_specs = (
        [x_spec] * multiple
        + [pl.BlockSpec((multiple, U, U), lambda i: (0, 0, 0)),   # weights, VMEM-resident
           pl.BlockSpec((1, U), lambda i: (0, 0)),                # summed biases
           pl.BlockSpec((1, U), lambda i: (0, 0))]                # V weight
    )
    # 2-D lane/sublane-dense outputs; singleton dim added after the call.
    out_shape = (
        jax.ShapeDtypeStruct((B_pad, U), jnp.float32),            # context_vector
        jax.ShapeDtypeStruct((B_pad, S), jnp.float32),            # attention_weights
    )
    out_specs = (
        pl.BlockSpec((block_b, U), lambda i: (i, 0)),
        pl.BlockSpec((block_b, S), lambda i: (i, 0)),
    )

    ctx2d, attn2d = pl.pallas_call(
        kernel,
        out_shape=out_shape,
        grid_spec=pltpu.PrefetchScalarGridSpec(
            num_scalar_prefetch=0,
            grid=grid,
            in_specs=in_specs,
            out_specs=out_specs,
        ),
        compiler_params=pltpu.CompilerParams(
            dimension_semantics=("parallel",),
            vmem_limit_bytes=int(vmem_cap * 0.75),
        ),
    )(*xs, w_stack, b_sum, vw2)

    ctx2d = ctx2d[:B]
    attn2d = attn2d[:B]
    return ctx2d[:, None, :], attn2d[:, None, :]


def init_params(key, units):
    """Deterministic synthetic params matching the PyTorch module's shapes.

    torch.nn.Linear(units, units): weight (units, units), bias (units,)
    torch.nn.Linear(units, 1):     weight (1, units),     bias (1,)
    """
    ks = jax.random.split(key, 10)
    xav = (2.0 / (units + units)) ** 0.5
    xav_v = (2.0 / (units + 1)) ** 0.5
    bound = 1.0 / (units ** 0.5)

    w1 = xav * jax.random.normal(ks[0], (units, units), jnp.float32)
    b1 = jax.random.uniform(ks[1], (units,), jnp.float32, -bound, bound)
    w2 = xav * jax.random.normal(ks[2], (units, units), jnp.float32)
    b2 = jax.random.uniform(ks[3], (units,), jnp.float32, -bound, bound)
    w3 = xav * jax.random.normal(ks[4], (units, units), jnp.float32)
    b3 = jax.random.uniform(ks[5], (units,), jnp.float32, -bound, bound)
    w4 = xav * jax.random.normal(ks[6], (units, units), jnp.float32)
    b4 = jax.random.uniform(ks[7], (units,), jnp.float32, -bound, bound)
    vw = xav_v * jax.random.normal(ks[8], (1, units), jnp.float32)
    vb = jax.random.uniform(ks[9], (1,), jnp.float32, -bound, bound)
    return (w1, b1, w2, b2, w3, b3, w4, b4, vw, vb)


def _reference(enc, enc1, enc2, enc3, params, multiple):
    """Plain-JAX reference mirroring the torch forward (includes vb)."""
    w1, b1, w2, b2, w3, b3, w4, b4, vw, vb = params
    h = enc @ w2.T + b2
    if multiple >= 2:
        h = h + enc1 @ w1.T + b1
    if multiple >= 3:
        h = h + enc2 @ w3.T + b3
    if multiple >= 4:
        h = h + enc3 @ w4.T + b4
    score = (jnp.tanh(h) @ vw.T + vb)[..., 0]          # (B, S)
    attn = jax.nn.softmax(score, axis=1)[:, None, :]   # (B, 1, S)
    ctx = jnp.einsum("bos,bsu->bou", attn, enc)        # (B, 1, U)
    return ctx, attn


if __name__ == "__main__":
    S, U = 8, 32
    key = jax.random.PRNGKey(0)
    k_in, k_p = jax.random.split(key)
    params = init_params(k_p, U)

    # (batch, multiple, matmul_dtype, tolerance): exercise the per-`multiple`
    # projection accumulation, the default bf16 input path, an exact f32 path,
    # and the batch-padding / multi-step-grid path.
    cases = [
        (2, 4, jnp.float32, 5e-3),
        (2, 2, jnp.bfloat16, 5e-2),
        (2, 1, jnp.bfloat16, 5e-2),
        (10, 4, jnp.bfloat16, 5e-2),   # batch padded 10 -> 16, grid of 2 steps
    ]
    for B, multiple, mm_dtype, tol in cases:
        kis = jax.random.split(jax.random.fold_in(k_in, B), 4)
        enc = jax.random.normal(kis[0], (B, S, U), jnp.float32)
        enc1 = jax.random.normal(kis[1], (B, S, U), jnp.float32)
        enc2 = jax.random.normal(kis[2], (B, S, U), jnp.float32)
        enc3 = jax.random.normal(kis[3], (B, S, U), jnp.float32)

        ctx, attn = bahdanau_attention(enc, enc1, enc2, enc3, params,
                                       multiple=multiple, matmul_dtype=mm_dtype)
        jax.block_until_ready((ctx, attn))

        ctx_ref, attn_ref = _reference(enc, enc1, enc2, enc3, params, multiple)
        assert ctx.shape == (B, 1, U) and attn.shape == (B, 1, S)
        assert jnp.allclose(ctx, ctx_ref, atol=tol, rtol=tol)
        assert jnp.allclose(attn, attn_ref, atol=tol, rtol=tol)
        assert jnp.allclose(jnp.sum(attn, axis=-1), 1.0, atol=1e-3)

    print("KERNEL_OK")
</pallas_src>

<mosaic_0001>
module attributes {stable_mosaic.version = 11 : i64} {
  func.func @_bahdanau_kernel(%arg0: i32, %arg1: memref<2x8x32xf32, #tpu.memory_space<vmem>>, %arg2: memref<2x8x32xf32, #tpu.memory_space<vmem>>, %arg3: memref<2x8x32xf32, #tpu.memory_space<vmem>>, %arg4: memref<2x8x32xf32, #tpu.memory_space<vmem>>, %arg5: memref<4x32x32xf32, #tpu.memory_space<vmem>>, %arg6: memref<1x32xf32, #tpu.memory_space<vmem>>, %arg7: memref<1x32xf32, #tpu.memory_space<vmem>>, %arg8: memref<2x32xf32, #tpu.memory_space<vmem>>, %arg9: memref<2x8xf32, #tpu.memory_space<vmem>>) attributes {dimension_semantics = [#tpu.dimension_semantics<parallel>], iteration_bounds = array<i64: 1>, scalar_prefetch = 0 : i64, scratch_operands = 0 : i64, tpu.core_type = #tpu.core_type<tc>, window_params = [{transform_indices = @transform_0, window_bounds = array<i64: 2, 8, 32>}, {transform_indices = @transform_1, window_bounds = array<i64: 2, 8, 32>}, {transform_indices = @transform_2, window_bounds = array<i64: 2, 8, 32>}, {transform_indices = @transform_3, window_bounds = array<i64: 2, 8, 32>}, {pipeline_mode = #tpu.pipeline_mode<synchronous>, transform_indices = @transform_4, window_bounds = array<i64: 4, 32, 32>}, {pipeline_mode = #tpu.pipeline_mode<synchronous>, transform_indices = @transform_5, window_bounds = array<i64: 1, 32>}, {pipeline_mode = #tpu.pipeline_mode<synchronous>, transform_indices = @transform_6, window_bounds = array<i64: 1, 32>}, {transform_indices = @transform_7, window_bounds = array<i64: 2, 32>}, {transform_indices = @transform_8, window_bounds = array<i64: 2, 8>}]} {
    %c0 = arith.constant 0 : index
    %c0_0 = arith.constant 0 : index
    %c0_1 = arith.constant 0 : index
    %0 = vector.load %arg1[%c0, %c0_0, %c0_1] : memref<2x8x32xf32, #tpu.memory_space<vmem>>, vector<2x8x32xf32>
    %1 = vector.shape_cast %0 : vector<2x8x32xf32> to vector<16x32xf32>
    %c0_2 = arith.constant 0 : index
    %c0_3 = arith.constant 0 : index
    %c0_4 = arith.constant 0 : index
    %2 = vector.load %arg5[%c0_2, %c0_3, %c0_4] : memref<4x32x32xf32, #tpu.memory_space<vmem>>, vector<1x32x32xf32>
    %3 = vector.shape_cast %2 : vector<1x32x32xf32> to vector<32x32xf32>
    %cst = arith.constant dense<0.000000e+00> : vector<16x32xf32>
    %4 = tpu.matmul %1, %3, %cst {dimension_numbers = #tpu.dot_dimension_numbers<[1], [0], [0], [1], [0, 0, 1, 1], [], []>} : vector<16x32xf32>, vector<32x32xf32>, vector<16x32xf32> -> vector<16x32xf32>
    %c0_5 = arith.constant 0 : index
    %c0_6 = arith.constant 0 : index
    %c0_7 = arith.constant 0 : index
    %5 = vector.load %arg2[%c0_5, %c0_6, %c0_7] : memref<2x8x32xf32, #tpu.memory_space<vmem>>, vector<2x8x32xf32>
    %6 = vector.shape_cast %5 : vector<2x8x32xf32> to vector<16x32xf32>
    %c1 = arith.constant 1 : index
    %c0_8 = arith.constant 0 : index
    %c0_9 = arith.constant 0 : index
    %7 = vector.load %arg5[%c1, %c0_8, %c0_9] : memref<4x32x32xf32, #tpu.memory_space<vmem>>, vector<1x32x32xf32>
    %8 = vector.shape_cast %7 : vector<1x32x32xf32> to vector<32x32xf32>
    %cst_10 = arith.constant dense<0.000000e+00> : vector<16x32xf32>
    %9 = tpu.matmul %6, %8, %cst_10 {dimension_numbers = #tpu.dot_dimension_numbers<[1], [0], [0], [1], [0, 0, 1, 1], [], []>} : vector<16x32xf32>, vector<32x32xf32>, vector<16x32xf32> -> vector<16x32xf32>
    %10 = arith.addf %4, %9 : vector<16x32xf32>
    %c0_11 = arith.constant 0 : index
    %c0_12 = arith.constant 0 : index
    %c0_13 = arith.constant 0 : index
    %11 = vector.load %arg3[%c0_11, %c0_12, %c0_13] : memref<2x8x32xf32, #tpu.memory_space<vmem>>, vector<2x8x32xf32>
    %12 = vector.shape_cast %11 : vector<2x8x32xf32> to vector<16x32xf32>
    %c2 = arith.constant 2 : index
    %c0_14 = arith.constant 0 : index
    %c0_15 = arith.constant 0 : index
    %13 = vector.load %arg5[%c2, %c0_14, %c0_15] : memref<4x32x32xf32, #tpu.memory_space<vmem>>, vector<1x32x32xf32>
    %14 = vector.shape_cast %13 : vector<1x32x32xf32> to vector<32x32xf32>
    %cst_16 = arith.constant dense<0.000000e+00> : vector<16x32xf32>
    %15 = tpu.matmul %12, %14, %cst_16 {dimension_numbers = #tpu.dot_dimension_numbers<[1], [0], [0], [1], [0, 0, 1, 1], [], []>} : vector<16x32xf32>, vector<32x32xf32>, vector<16x32xf32> -> vector<16x32xf32>
    %16 = arith.addf %10, %15 : vector<16x32xf32>
    %c0_17 = arith.constant 0 : index
    %c0_18 = arith.constant 0 : index
    %c0_19 = arith.constant 0 : index
    %17 = vector.load %arg4[%c0_17, %c0_18, %c0_19] : memref<2x8x32xf32, #tpu.memory_space<vmem>>, vector<2x8x32xf32>
    %18 = vector.shape_cast %17 : vector<2x8x32xf32> to vector<16x32xf32>
    %c3 = arith.constant 3 : index
    %c0_20 = arith.constant 0 : index
    %c0_21 = arith.constant 0 : index
    %19 = vector.load %arg5[%c3, %c0_20, %c0_21] : memref<4x32x32xf32, #tpu.memory_space<vmem>>, vector<1x32x32xf32>
    %20 = vector.shape_cast %19 : vector<1x32x32xf32> to vector<32x32xf32>
    %cst_22 = arith.constant dense<0.000000e+00> : vector<16x32xf32>
    %21 = tpu.matmul %18, %20, %cst_22 {dimension_numbers = #tpu.dot_dimension_numbers<[1], [0], [0], [1], [0, 0, 1, 1], [], []>} : vector<16x32xf32>, vector<32x32xf32>, vector<16x32xf32> -> vector<16x32xf32>
    %22 = arith.addf %16, %21 : vector<16x32xf32>
    %23 = vector.shape_cast %22 : vector<16x32xf32> to vector<2x8x32xf32>
    %c0_23 = arith.constant 0 : index
    %c0_24 = arith.constant 0 : index
    %24 = vector.load %arg6[%c0_23, %c0_24] : memref<1x32xf32, #tpu.memory_space<vmem>>, vector<1x32xf32>
    %25 = vector.shape_cast %24 : vector<1x32xf32> to vector<1x1x32xf32>
    %26 = vector.broadcast %25 : vector<1x1x32xf32> to vector<2x8x32xf32>
    %27 = arith.addf %23, %26 : vector<2x8x32xf32>
    %28 = math.tanh %27 : vector<2x8x32xf32>
    %c0_25 = arith.constant 0 : index
    %c0_26 = arith.constant 0 : index
    %29 = vector.load %arg7[%c0_25, %c0_26] : memref<1x32xf32, #tpu.memory_space<vmem>>, vector<1x32xf32>
    %30 = vector.shape_cast %29 : vector<1x32xf32> to vector<1x1x32xf32>
    %31 = vector.broadcast %30 : vector<1x1x32xf32> to vector<2x8x32xf32>
    %32 = arith.mulf %28, %31 : vector<2x8x32xf32>
    %cst_27 = arith.constant dense<0.000000e+00> : vector<2x8xf32>
    %33 = vector.multi_reduction <add>, %32, %cst_27 [2] : vector<2x8x32xf32> to vector<2x8xf32>
    %cst_28 = arith.constant dense<0xFF800000> : vector<2xf32>
    %34 = vector.multi_reduction <maximumf>, %33, %cst_28 [1] : vector<2x8xf32> to vector<2xf32>
    %35 = vector.shape_cast %34 : vector<2xf32> to vector<2x1xf32>
    %36 = vector.broadcast %35 : vector<2x1xf32> to vector<2x8xf32>
    %37 = arith.subf %33, %36 : vector<2x8xf32>
    %38 = math.exp %37 : vector<2x8xf32>
    %cst_29 = arith.constant dense<0.000000e+00> : vector<2xf32>
    %39 = vector.multi_reduction <add>, %38, %cst_29 [1] : vector<2x8xf32> to vector<2xf32>
    %40 = vector.shape_cast %39 : vector<2xf32> to vector<2x1xf32>
    %41 = vector.broadcast %40 : vector<2x1xf32> to vector<2x8xf32>
    %42 = arith.divf %38, %41 : vector<2x8xf32>
    %43 = vector.shape_cast %42 : vector<2x8xf32> to vector<2x1x8xf32>
    "tpu.trace_start"() <{level = 10 : i32, message = "bqs,bsu->bqu"}> : () -> ()
    %cst_30 = arith.constant dense<0.000000e+00> : vector<2x1x32xf32>
    %44 = tpu.matmul %43, %0, %cst_30 {dimension_numbers = #tpu.dot_dimension_numbers<[2], [1], [1], [2], [0, 0, 0, 1, 1, 2], [0], [0]>} : vector<2x1x8xf32>, vector<2x8x32xf32>, vector<2x1x32xf32> -> vector<2x1x32xf32>
    "tpu.trace_stop"() : () -> ()
    %45 = vector.shape_cast %44 : vector<2x1x32xf32> to vector<2x32xf32>
    %c0_31 = arith.constant 0 : index
    %c0_32 = arith.constant 0 : index
    %46 = vector.load %arg8[%c0_31, %c0_32] : memref<2x32xf32, #tpu.memory_space<vmem>>, vector<2x32xf32>
    tpu.vector_store %arg8[%c0_31, %c0_32], %45 {strides = array<i32>} : memref<2x32xf32, #tpu.memory_space<vmem>>, vector<2x32xf32>,
    %c0_33 = arith.constant 0 : index
    %c0_34 = arith.constant 0 : index
    %47 = vector.load %arg9[%c0_33, %c0_34] : memref<2x8xf32, #tpu.memory_space<vmem>>, vector<2x8xf32>
    tpu.vector_store %arg9[%c0_33, %c0_34], %42 {strides = array<i32>} : memref<2x8xf32, #tpu.memory_space<vmem>>, vector<2x8xf32>,
    return
  }
  func.func @transform_0(%arg0: i32) -> (i32, i32, i32) {
    %c0_i32 = arith.constant 0 : i32
    %c0_i32_0 = arith.constant 0 : i32
    %c0_i32_1 = arith.constant 0 : i32
    return %arg0, %c0_i32, %c0_i32_0 : i32, i32, i32
  }
  func.func @transform_1(%arg0: i32) -> (i32, i32, i32) {
    %c0_i32 = arith.constant 0 : i32
    %c0_i32_0 = arith.constant 0 : i32
    %c0_i32_1 = arith.constant 0 : i32
    return %arg0, %c0_i32, %c0_i32_0 : i32, i32, i32
  }
  func.func @transform_2(%arg0: i32) -> (i32, i32, i32) {
    %c0_i32 = arith.constant 0 : i32
    %c0_i32_0 = arith.constant 0 : i32
    %c0_i32_1 = arith.constant 0 : i32
    return %arg0, %c0_i32, %c0_i32_0 : i32, i32, i32
  }
  func.func @transform_3(%arg0: i32) -> (i32, i32, i32) {
    %c0_i32 = arith.constant 0 : i32
    %c0_i32_0 = arith.constant 0 : i32
    %c0_i32_1 = arith.constant 0 : i32
    return %arg0, %c0_i32, %c0_i32_0 : i32, i32, i32
  }
  func.func @transform_4(%arg0: i32) -> (i32, i32, i32) {
    %c0_i32 = arith.constant 0 : i32
    %c0_i32_0 = arith.constant 0 : i32
    %c0_i32_1 = arith.constant 0 : i32
    %c0_i32_2 = arith.constant 0 : i32
    return %c0_i32, %c0_i32_0, %c0_i32_1 : i32, i32, i32
  }
  func.func @transform_5(%arg0: i32) -> (i32, i32) {
    %c0_i32 = arith.constant 0 : i32
    %c0_i32_0 = arith.constant 0 : i32
    %c0_i32_1 = arith.constant 0 : i32
    return %c0_i32, %c0_i32_0 : i32, i32
  }
  func.func @transform_6(%arg0: i32) -> (i32, i32) {
    %c0_i32 = arith.constant 0 : i32
    %c0_i32_0 = arith.constant 0 : i32
    %c0_i32_1 = arith.constant 0 : i32
    return %c0_i32, %c0_i32_0 : i32, i32
  }
  func.func @transform_7(%arg0: i32) -> (i32, i32) {
    %c0_i32 = arith.constant 0 : i32
    %c0_i32_0 = arith.constant 0 : i32
    return %arg0, %c0_i32 : i32, i32
  }
  func.func @transform_8(%arg0: i32) -> (i32, i32) {
    %c0_i32 = arith.constant 0 : i32
    %c0_i32_0 = arith.constant 0 : i32
    return %arg0, %c0_i32 : i32, i32
  }
}

</mosaic_0001>

<llo_original>
// kernel: tpu_custom_call.1
$region0: #{tpu_custom_call.1}
  #allocation0 [shape = 'u32[]', space=smem, size = 0x4, offset = 0x4, fixed_abs, tag = 'smem constant byte address 0x4 - core index']
  #allocation1 [shape = 'u32[72,128]{1,0:T(1,128)}', space=vmem, size = 0x9000, scoped, tag = 'internal scratch']
  %s0 = inlined_call_operand.hbm [shape: f32[2,8,32], index: 0, kind: input, shape index: {}]
  %s1 = inlined_call_operand.hbm [shape: f32[2,8,32], index: 1, kind: input, shape index: {}]
  %s2 = inlined_call_operand.hbm [shape: f32[2,8,32], index: 2, kind: input, shape index: {}]
  %s3 = inlined_call_operand.hbm [shape: f32[2,8,32], index: 3, kind: input, shape index: {}]
  %s4 = inlined_call_operand.hbm [shape: f32[4,32,32], index: 4, kind: input, shape index: {}]
  %s5 = inlined_call_operand.vmem [shape: f32[1,32], index: 5, kind: input, shape index: {}]
  %s6 = inlined_call_operand.vmem [shape: f32[1,32], index: 6, kind: input, shape index: {}]
  %s7 = inlined_call_operand.hbm [shape: f32[2,32], index: 7, kind: output, shape index: {0}]
  %s8 = inlined_call_operand.hbm [shape: f32[2,8], index: 8, kind: output, shape index: {1}]
  %9 = xla_tuple %s7, %s8
  %s10 = sld [smem:[#allocation0]]
  $region66: #{tpu_custom_call.1} parent=0
    _
  %s12 = ssub.s32 1, %s10
  %s13 = scalar_select 0, %s12, %s10
  $region1: #{tpu_custom_call.1} parent=0
    #allocation2 [shape = 'u8[8192]{0}', space=vmem, size = 0x2000, scoped, tag = 'input window, operand 0, single buffered']
    #allocation3 [shape = 's32[1]{0}', space=sflag, size = 0x4, scoped, tag = 'scoped memory for tpu_custom_call.1']
    #allocation4 [shape = 's32[1]{0}', space=sflag, size = 0x4, scoped, tag = 'scoped memory for tpu_custom_call.1']
    #allocation5 [shape = 'u8[8192]{0}', space=vmem, size = 0x2000, scoped, tag = 'input window, operand 1, single buffered']
    #allocation6 [shape = 's32[1]{0}', space=sflag, size = 0x4, scoped, tag = 'scoped memory for tpu_custom_call.1']
    #allocation7 [shape = 'u8[8192]{0}', space=vmem, size = 0x2000, scoped, tag = 'input window, operand 2, single buffered']
    #allocation8 [shape = 'u8[8192]{0}', space=vmem, size = 0x2000, scoped, tag = 'input window, operand 3, single buffered']
    #allocation9 [shape = 's32[1]{0}', space=sflag, size = 0x4, scoped, tag = 'scoped memory for tpu_custom_call.1']
    #allocation10 [shape = 'u8[65536]{0}', space=vmem, size = 0x10000, scoped, tag = 'input window, operand 4, single buffered']
    #allocation11 [shape = 'u8[1024]{0}', space=vmem, size = 0x400, scoped, tag = 'output window, operand 0, single buffered']
    #allocation12 [shape = 'u8[1024]{0}', space=vmem, size = 0x400, scoped, tag = 'output window, operand 1, single buffered']
    #allocation13 [shape = 's32[1]{0}', space=sflag, size = 0x4, scoped, tag = 'scoped memory for tpu_custom_call.1']
    %14 = vsyncpa [#allocation3], 0
    %15 = vsyncpa [#allocation6], 0
    %16 = vsyncpa [#allocation9], 0
    %17 = vsyncpa [#allocation4], 0
    %18 = vsyncpa [#allocation13], 0
    // Predicated region
    $region2: #{tpu_custom_call.1} parent=1 // pred_check
      _
    $region3: #{tpu_custom_call.1} parent=1 // pred_check_branch
      %20 = sbr.rel (0) target = $region5
    $region4: #{tpu_custom_call.1} parent=1 // pred_region
      %22 = vsyncadd [#allocation3], 0
      %s23 = sshll.u32 %s0, 4
      %s24 = int_to_ptr.hbm [resolvable:$true] %s23
      %s25 = sshll.u32 [#allocation2], 4
      %s26 = int_to_ptr.vmem [resolvable:$true] %s25
      %31 = dma.hbm_to_vmem [thread:$0]  %s24, 256, %s26, [#allocation3], 128, 128, 8
    $region5: #{tpu_custom_call.1} parent=1 // pred_fallthru
      _
    // Predicated region
    $region6: #{tpu_custom_call.1} parent=1 // pred_check
      _
    $region7: #{tpu_custom_call.1} parent=1 // pred_check_branch
      %33 = sbr.rel (0) target = $region9
    $region8: #{tpu_custom_call.1} parent=1 // pred_region
      %35 = vsyncadd [#allocation6], 0
      %s36 = sshll.u32 %s1, 4
      %s37 = int_to_ptr.hbm [resolvable:$true] %s36
      %s38 = sshll.u32 [#allocation5], 4
      %s39 = int_to_ptr.vmem [resolvable:$true] %s38
      %44 = dma.hbm_to_vmem [thread:$0]  %s37, 256, %s39, [#allocation6], 128, 128, 8
    $region9: #{tpu_custom_call.1} parent=1 // pred_fallthru
      _
    // Predicated region
    $region10: #{tpu_custom_call.1} parent=1 // pred_check
      _
    $region11: #{tpu_custom_call.1} parent=1 // pred_check_branch
      %46 = sbr.rel (0) target = $region13
    $region12: #{tpu_custom_call.1} parent=1 // pred_region
      %48 = vsyncadd [#allocation6], 0
      %s49 = sshll.u32 %s2, 4
      %s50 = int_to_ptr.hbm [resolvable:$true] %s49
      %s51 = sshll.u32 [#allocation7], 4
      %s52 = int_to_ptr.vmem [resolvable:$true] %s51
      %57 = dma.hbm_to_vmem [thread:$0]  %s50, 256, %s52, [#allocation6], 128, 128, 8
    $region13: #{tpu_custom_call.1} parent=1 // pred_fallthru
      _
    // Predicated region
    $region14: #{tpu_custom_call.1} parent=1 // pred_check
      _
    $region15: #{tpu_custom_call.1} parent=1 // pred_check_branch
      %59 = sbr.rel (0) target = $region17
    $region16: #{tpu_custom_call.1} parent=1 // pred_region
      %61 = vsyncadd [#allocation9], 0
      %s62 = sshll.u32 %s3, 4
      %s63 = int_to_ptr.hbm [resolvable:$true] %s62
      %s64 = sshll.u32 [#allocation8], 4
      %s65 = int_to_ptr.vmem [resolvable:$true] %s64
      %70 = dma.hbm_to_vmem [thread:$0]  %s63, 256, %s65, [#allocation9], 128, 128, 8
    $region17: #{tpu_custom_call.1} parent=1 // pred_fallthru
      _
    // Predicated region
    $region18: #{tpu_custom_call.1} parent=1 // pred_check
      _
    $region19: #{tpu_custom_call.1} parent=1 // pred_check_branch
      %72 = sbr.rel (0) target = $region21
    $region20: #{tpu_custom_call.1} parent=1 // pred_region
      %74 = vsyncadd [#allocation9], 0
      %s75 = sshll.u32 %s4, 4
      %s76 = int_to_ptr.hbm [resolvable:$true] %s75
      %s77 = sshll.u32 [#allocation10], 4
      %s78 = int_to_ptr.vmem [resolvable:$true] %s77
      %83 = dma.hbm_to_vmem [thread:$0]  %s76, 2048, %s78, [#allocation9], 128, 128, 8
    $region21: #{tpu_custom_call.1} parent=1 // pred_fallthru
      _
    // Predicated region
    $region22: #{tpu_custom_call.1} parent=1 // pred_check
      _
    $region23: #{tpu_custom_call.1} parent=1 // pred_check_branch
      %85 = sbr.rel (0) target = $region25
    $region24: #{tpu_custom_call.1} parent=1 // pred_region
      _
    $region25: #{tpu_custom_call.1} parent=1 // pred_fallthru
      _
    // Predicated region
    $region26: #{tpu_custom_call.1} parent=1 // pred_check
      _
    $region27: #{tpu_custom_call.1} parent=1 // pred_check_branch
      %87 = sbr.rel (0) target = $region29
    $region28: #{tpu_custom_call.1} parent=1 // pred_region
      _
    $region29: #{tpu_custom_call.1} parent=1 // pred_fallthru
      _
    // Predicated region
    $region30: #{tpu_custom_call.1} parent=1 // pred_check
      _
    $region31: #{tpu_custom_call.1} parent=1 // pred_check_branch
      %89 = sbr.rel (0) target = $region33
    $region32: #{tpu_custom_call.1} parent=1 // pred_region
      %91 = dma.done [#allocation3], 256
    $region33: #{tpu_custom_call.1} parent=1 // pred_fallthru
      _
    // Predicated region
    $region34: #{tpu_custom_call.1} parent=1 // pred_check
      _
    $region35: #{tpu_custom_call.1} parent=1 // pred_check_branch
      %93 = sbr.rel (0) target = $region37
    $region36: #{tpu_custom_call.1} parent=1 // pred_region
      %95 = dma.done [#allocation6], 256
    $region37: #{tpu_custom_call.1} parent=1 // pred_fallthru
      _
    // Predicated region
    $region38: #{tpu_custom_call.1} parent=1 // pred_check
      _
    $region39: #{tpu_custom_call.1} parent=1 // pred_check_branch
      %97 = sbr.rel (0) target = $region41
    $region40: #{tpu_custom_call.1} parent=1 // pred_region
      %99 = dma.done [#allocation6], 256
    $region41: #{tpu_custom_call.1} parent=1 // pred_fallthru
      _
    // Predicated region
    $region42: #{tpu_custom_call.1} parent=1 // pred_check
      _
    $region43: #{tpu_custom_call.1} parent=1 // pred_check_branch
      %101 = sbr.rel (0) target = $region45
    $region44: #{tpu_custom_call.1} parent=1 // pred_region
      %103 = dma.done [#allocation9], 256
    $region45: #{tpu_custom_call.1} parent=1 // pred_fallthru
      _
    // Predicated region
    $region46: #{tpu_custom_call.1} parent=1 // pred_check
      _
    $region47: #{tpu_custom_call.1} parent=1 // pred_check_branch
      %105 = sbr.rel (0) target = $region49
    $region48: #{tpu_custom_call.1} parent=1 // pred_region
      %107 = dma.done [#allocation9], 2048
    $region49: #{tpu_custom_call.1} parent=1 // pred_fallthru
      _
    %v108 = vld [vmem:[#allocation2] sm:$0xff]
    %v109 = vld [vmem:[#allocation2 + $0x8] sm:$0xff]
    %v110 = vld [vmem:[#allocation10] sm:$0xff]
    %v111 = vld [vmem:[#allocation10 + $0x8] sm:$0xff]
    %v112 = vld [vmem:[#allocation10 + $0x10] sm:$0xff]
    %v113 = vld [vmem:[#allocation10 + $0x18] sm:$0xff]
    %v114 = vld [vmem:[#allocation5] sm:$0xff]
    %v115 = vld [vmem:[#allocation5 + $0x8] sm:$0xff]
    %s116 = scalar_lea.vmem [#allocation10], 32
    %v117 = vld [vmem:[%s116] sm:$0xff]
    %v118 = vld [vmem:[%s116 + $0x8] sm:$0xff]
    %v119 = vld [vmem:[%s116 + $0x10] sm:$0xff]
    %v120 = vld [vmem:[%s116 + $0x18] sm:$0xff]
    %vm121 = vcmask 261120
    %v123 = vsel %vm121, %v114, 0
    %v126 = vsel %vm121, %v115, 0
    %128 = vmatpush.msra.mxu0 0.0
    %129 = vmatpush.msra.mxu0 0.0
    %130 = vmatpush.msra.mxu0 0.0
    %131 = vmatpush.msra.mxu0 0.0
    %132 = vmatpush.msra.mxu0 0.0
    %133 = vmatpush.msra.mxu0 0.0
    %134 = vmatpush.msra.mxu0 0.0
    %135 = vmatpush.msra.mxu0 0.0
    %136 = vmatpush.msra.mxu0 0.0
    %137 = vmatpush.msra.mxu0 0.0
    %138 = vmatpush.msra.mxu0 0.0
    %139 = vmatpush.msra.mxu0 0.0
    %140 = vmatpush.msra.mxu0 %v120
    %141 = vmatpush.msra.mxu0 %v119
    %142 = vmatpush.msra.mxu0 %v118
    %143 = vmatpush.msra.mxu0 %v117
    %144 = vmatmul.f32.gmra.mxu0 %v123
    %v145 = vpop.f32.mrf.mxu0
    %v146 = vadd.f32 0.0, %v145
    %147 = vmatmul.f32.gmra.mxu0 %v126
    %v148 = vpop.f32.mrf.mxu0
    %v149 = vadd.f32 0.0, %v148
    %150 = vdwg.mxu0
    %v152 = vsel %vm121, %v108, 0
    %v155 = vsel %vm121, %v109, 0
    %157 = vmatpush.msra.mxu0 0.0
    %158 = vmatpush.msra.mxu0 0.0
    %159 = vmatpush.msra.mxu0 0.0
    %160 = vmatpush.msra.mxu0 0.0
    %161 = vmatpush.msra.mxu0 0.0
    %162 = vmatpush.msra.mxu0 0.0
    %163 = vmatpush.msra.mxu0 0.0
    %164 = vmatpush.msra.mxu0 0.0
    %165 = vmatpush.msra.mxu0 0.0
    %166 = vmatpush.msra.mxu0 0.0
    %167 = vmatpush.msra.mxu0 0.0
    %168 = vmatpush.msra.mxu0 0.0
    %169 = vmatpush.msra.mxu0 %v113
    %170 = vmatpush.msra.mxu0 %v112
    %171 = vmatpush.msra.mxu0 %v111
    %172 = vmatpush.msra.mxu0 %v110
    %173 = vmatmul.f32.gmra.mxu0 %v152
    %v174 = vpop.f32.mrf.mxu0
    %v175 = vadd.f32 %v146, %v174
    %176 = vmatmul.f32.gmra.mxu0 %v155
    %v177 = vpop.f32.mrf.mxu0
    %v178 = vadd.f32 %v149, %v177
    %179 = vdwg.mxu0
    %v180 = vld [vmem:[#allocation7] sm:$0xff]
    %v181 = vld [vmem:[#allocation7 + $0x8] sm:$0xff]
    %s182 = scalar_lea.vmem [#allocation10], 64
    %v183 = vld [vmem:[%s182] sm:$0xff]
    %v184 = vld [vmem:[%s182 + $0x8] sm:$0xff]
    %v185 = vld [vmem:[%s182 + $0x10] sm:$0xff]
    %v186 = vld [vmem:[%s182 + $0x18] sm:$0xff]
    %v188 = vsel %vm121, %v180, 0
    %v191 = vsel %vm121, %v181, 0
    %193 = vmatpush.msra.mxu0 0.0
    %194 = vmatpush.msra.mxu0 0.0
    %195 = vmatpush.msra.mxu0 0.0
    %196 = vmatpush.msra.mxu0 0.0
    %197 = vmatpush.msra.mxu0 0.0
    %198 = vmatpush.msra.mxu0 0.0
    %199 = vmatpush.msra.mxu0 0.0
    %200 = vmatpush.msra.mxu0 0.0
    %201 = vmatpush.msra.mxu0 0.0
    %202 = vmatpush.msra.mxu0 0.0
    %203 = vmatpush.msra.mxu0 0.0
    %204 = vmatpush.msra.mxu0 0.0
    %205 = vmatpush.msra.mxu0 %v186
    %206 = vmatpush.msra.mxu0 %v185
    %207 = vmatpush.msra.mxu0 %v184
    %208 = vmatpush.msra.mxu0 %v183
    %209 = vmatmul.f32.gmra.mxu0 %v188
    %v210 = vpop.f32.mrf.mxu0
    %v211 = vadd.f32 0.0, %v210
    %212 = vmatmul.f32.gmra.mxu0 %v191
    %v213 = vpop.f32.mrf.mxu0
    %v214 = vadd.f32 0.0, %v213
    %215 = vdwg.mxu0
    %v216 = vadd.f32 %v175, %v211
    %v217 = vadd.f32 %v178, %v214
    %v218 = vld [vmem:[#allocation8] sm:$0xff]
    %v219 = vld [vmem:[#allocation8 + $0x8] sm:$0xff]
    %s220 = scalar_lea.vmem [#allocation10], 96
    %v221 = vld [vmem:[%s220] sm:$0xff]
    %v222 = vld [vmem:[%s220 + $0x8] sm:$0xff]
    %v223 = vld [vmem:[%s220 + $0x10] sm:$0xff]
    %v224 = vld [vmem:[%s220 + $0x18] sm:$0xff]
    %v226 = vsel %vm121, %v218, 0
    %v229 = vsel %vm121, %v219, 0
    %231 = vmatpush.msra.mxu0 0.0
    %232 = vmatpush.msra.mxu0 0.0
    %233 = vmatpush.msra.mxu0 0.0
    %234 = vmatpush.msra.mxu0 0.0
    %235 = vmatpush.msra.mxu0 0.0
    %236 = vmatpush.msra.mxu0 0.0
    %237 = vmatpush.msra.mxu0 0.0
    %238 = vmatpush.msra.mxu0 0.0
    %239 = vmatpush.msra.mxu0 0.0
    %240 = vmatpush.msra.mxu0 0.0
    %241 = vmatpush.msra.mxu0 0.0
    %242 = vmatpush.msra.mxu0 0.0
    %243 = vmatpush.msra.mxu0 %v224
    %244 = vmatpush.msra.mxu0 %v223
    %245 = vmatpush.msra.mxu0 %v222
    %246 = vmatpush.msra.mxu0 %v221
    %247 = vmatmul.f32.gmra.mxu0 %v226
    %v248 = vpop.f32.mrf.mxu0
    %v249 = vadd.f32 0.0, %v248
    %250 = vmatmul.f32.gmra.mxu0 %v229
    %v251 = vpop.f32.mrf.mxu0
    %v252 = vadd.f32 0.0, %v251
    %253 = vdwg.mxu0
    %v254 = vadd.f32 %v216, %v249
    %v255 = vadd.f32 %v217, %v252
    %v256 = vld [vmem:[%s5] sm:$0x1]
    %v258 = vperm.slane %v256, 0
    %v260 = vadd.f32 %v254, %v258
    %v261 = vadd.f32 %v255, %v258
    %v262 = vtanh.pop %v260
    %v263 = vtanh.pop %v261
    %v264 = vld [vmem:[%s6] sm:$0x1]
    %v266 = vperm.slane %v264, 0
    %v268 = vmul.f32 %v262, %v266
    %v269 = vmul.f32 %v263, %v266
    %v270 = vsel %vm121, %v268, 0.0
    %271 = vadd.xlane.f32.xlu0 %v270
    %v272 = vpop.xlane.xlu0 %271
    %v273 = vsel %vm121, %v269, 0.0
    %274 = vadd.xlane.f32.xlu0 %v273
    %v275 = vpop.xlane.xlu0 %274
    %v278 = vlaneseq
    %v279 = vand.u32 %v278, 127
    %v280 = vperm.slane %v272, %v279
    %v281 = vperm.slane %v275, %v279
    %vm282 = vcmask 1041409
    %v283 = vsel %vm282, %v281, %v280
    %vm285 = vcmask 58368
    %v286 = vsel %vm285, %v283, -inf
    %287 = vmax.xlane.f32.xlu0 %v286
    %v288 = vpop.xlane.xlu0 %287
    %v290 = vperm.slane %v288, 0
    %v291 = vperm.slane %v288, 1
    %v294 = vsub.f32 %v272, %v290
    %v295 = vsub.f32 %v275, %v291
    %v296 = vmul.f32 %v294, 1.442695
    %v297 = vpow.pop %v296
    %v298 = vmul.f32 %v295, 1.442695
    %v299 = vpow.pop %v298
    %302 = vset.pattern.permute.xlu0 0
    %303 = vperm.xlu0 %302, %v297
    %v304 = vpop.permute.xlu0 %303
    %305 = vset.pattern.permute.xlu0 0
    %306 = vperm.xlu0 %305, %v299
    %v307 = vpop.permute.xlu0 %306
    %v308 = vperm.slane %v304, %v279
    %v309 = vperm.slane %v307, %v279
    %v310 = vsel %vm282, %v309, %v308
    %v312 = vsel %vm285, %v310, 0.0
    %313 = vadd.xlane.f32.xlu0 %v312
    %v314 = vpop.xlane.xlu0 %313
    %v316 = vperm.slane %v314, 0
    %v317 = vperm.slane %v314, 1
    %v320 = vrcp.pop %v316
    %v321 = vmul.f32 %v316, %v320
    %v322 = vsub.f32 1.0, %v321
    %v323 = vmul.f32 %v320, %v322
    %v324 = vadd.f32 %v320, %v323
    %vm325 = vweird.f32 %v316
    %vm326 = vweird.f32 %v320
    %vm327 = vmor %vm325, %vm326
    %v328 = vsel %vm327, %v320, %v324
    %v329 = vand.u32 2147483647, %v316
    %vm330 = vcmp.eq.f32.partialorder %v329, 8.507059e+37
    %v331 = vand.u32 %v316, 2147483648
    %v332 = vor.u32 1.1754944e-38, %v331
    %v333 = vsel %vm330, %v332, %v328
    %v334 = vmul.f32 %v297, %v333
    %v335 = vrcp.pop %v317
    %v336 = vmul.f32 %v317, %v335
    %v337 = vsub.f32 1.0, %v336
    %v338 = vmul.f32 %v335, %v337
    %v339 = vadd.f32 %v335, %v338
    %vm340 = vweird.f32 %v317
    %vm341 = vweird.f32 %v335
    %vm342 = vmor %vm340, %vm341
    %v343 = vsel %vm342, %v335, %v339
    %v344 = vand.u32 2147483647, %v317
    %vm345 = vcmp.eq.f32.partialorder %v344, 8.507059e+37
    %v346 = vand.u32 %v317, 2147483648
    %v347 = vor.u32 1.1754944e-38, %v346
    %v348 = vsel %vm345, %v347, %v343
    %v349 = vmul.f32 %v299, %v348
    %351 = vset.pattern.permute.xlu0 0
    %352 = vperm.xlu0 %351, %v334
    %v353 = vpop.permute.xlu0 %352
    %v354 = vperm.slane %v353, %v279
    %vm355 = vcmask 64512
    %v356 = vsel %vm355, %v354, 0
    %358 = vmatpush.msra.mxu0 0.0
    %359 = vmatpush.msra.mxu0 0.0
    %360 = vmatpush.msra.mxu0 0.0
    %361 = vmatpush.msra.mxu0 0.0
    %362 = vmatpush.msra.mxu0 0.0
    %363 = vmatpush.msra.mxu0 0.0
    %364 = vmatpush.msra.mxu0 0.0
    %365 = vmatpush.msra.mxu0 0.0
    %366 = vmatpush.msra.mxu0 0.0
    %367 = vmatpush.msra.mxu0 0.0
    %368 = vmatpush.msra.mxu0 0.0
    %369 = vmatpush.msra.mxu0 0.0
    %370 = vmatpush.msra.mxu0 0.0
    %371 = vmatpush.msra.mxu0 0.0
    %372 = vmatpush.msra.mxu0 0.0
    %373 = vmatpush.msra.mxu0 %v108
    %374 = vmatmul.f32.gmra.mxu0 %v356
    %v375 = vpop.f32.mrf.mxu0
    %v376 = vadd.f32 0.0, %v375
    %377 = vdwg.mxu0
    %379 = vset.pattern.permute.xlu0 0
    %380 = vperm.xlu0 %379, %v349
    %v381 = vpop.permute.xlu0 %380
    %v382 = vperm.slane %v381, %v279
    %v383 = vsel %vm355, %v382, 0
    %385 = vmatpush.msra.mxu0 0.0
    %386 = vmatpush.msra.mxu0 0.0
    %387 = vmatpush.msra.mxu0 0.0
    %388 = vmatpush.msra.mxu0 0.0
    %389 = vmatpush.msra.mxu0 0.0
    %390 = vmatpush.msra.mxu0 0.0
    %391 = vmatpush.msra.mxu0 0.0
    %392 = vmatpush.msra.mxu0 0.0
    %393 = vmatpush.msra.mxu0 0.0
    %394 = vmatpush.msra.mxu0 0.0
    %395 = vmatpush.msra.mxu0 0.0
    %396 = vmatpush.msra.mxu0 0.0
    %397 = vmatpush.msra.mxu0 0.0
    %398 = vmatpush.msra.mxu0 0.0
    %399 = vmatpush.msra.mxu0 0.0
    %400 = vmatpush.msra.mxu0 %v109
    %401 = vmatmul.f32.gmra.mxu0 %v383
    %v402 = vpop.f32.mrf.mxu0
    %v403 = vadd.f32 0.0, %v402
    %404 = vdwg.mxu0
    %v407 = vrot.slane %v403, 7
    %v408 = vsel %vm282, %v407, %v376
    %vm410 = vcmask 254976
    %411 = vst.msk [vmem:[#allocation11] sm:$0x3] %vm410, %v408
    %v412 = vsel %vm282, %v382, %v354
    %414 = vst.msk [vmem:[#allocation12] sm:$0x3] %vm285, %v412
    // Predicated region
    $region50: #{tpu_custom_call.1} parent=1 // pred_check
      _
    $region51: #{tpu_custom_call.1} parent=1 // pred_check_branch
      %416 = sbr.rel (0) target = $region53
    $region52: #{tpu_custom_call.1} parent=1 // pred_region
      %418 = vsyncadd [#allocation4], 0
      %s420 = sshll.u32 [#allocation11], 4
      %s421 = int_to_ptr.vmem [resolvable:$true] %s420
      %s422 = sshll.u32 %s7, 4
      %s423 = int_to_ptr.hbm [resolvable:$true] %s422
      %425 = dma.vmem_to_hbm [thread:$0]  %s421, 32, %s423, [#allocation4]
    $region53: #{tpu_custom_call.1} parent=1 // pred_fallthru
      _
    // Predicated region
    $region54: #{tpu_custom_call.1} parent=1 // pred_check
      _
    $region55: #{tpu_custom_call.1} parent=1 // pred_check_branch
      %427 = sbr.rel (0) target = $region57
    $region56: #{tpu_custom_call.1} parent=1 // pred_region
      %429 = vsyncadd [#allocation13], 0
      %s431 = sshll.u32 [#allocation12], 4
      %s432 = int_to_ptr.vmem [resolvable:$true] %s431
      %s433 = sshll.u32 %s8, 4
      %s434 = int_to_ptr.hbm [resolvable:$true] %s433
      %436 = dma.vmem_to_hbm [thread:$0]  %s432, 32, %s434, [#allocation13]
    $region57: #{tpu_custom_call.1} parent=1 // pred_fallthru
      _
    // Predicated region
    $region58: #{tpu_custom_call.1} parent=1 // pred_check
      _
    $region59: #{tpu_custom_call.1} parent=1 // pred_check_branch
      %438 = sbr.rel (0) target = $region61
    $region60: #{tpu_custom_call.1} parent=1 // pred_region
      %440 = dma.done [#allocation4], 32
    $region61: #{tpu_custom_call.1} parent=1 // pred_fallthru
      _
    // Predicated region
    $region62: #{tpu_custom_call.1} parent=1 // pred_check
      _
    $region63: #{tpu_custom_call.1} parent=1 // pred_check_branch
      %442 = sbr.rel (0) target = $region65
    $region64: #{tpu_custom_call.1} parent=1 // pred_region
      %444 = dma.done [#allocation13], 32
    $region65: #{tpu_custom_call.1} parent=1 // pred_fallthru
      _
    %445 = vsyncpa [#allocation3], 1
    %446 = vsyncpa [#allocation6], 1
    %447 = vsyncpa [#allocation9], 1
    %448 = vsyncpa [#allocation4], 1
    %449 = vsyncpa [#allocation13], 1

</llo_original>
